<compile_context>
chip_gen: v6e
topology: v6e:2x2x1
jax: 0.10.0
libtpu: 0.0.40
codegen_flags: <defaults>
</compile_context>

<pallas_src>
import math
from functools import partial

import jax
import jax.numpy as jnp
from jax.experimental import pallas as pl
from jax.experimental.pallas import tpu as pltpu

LANE = 128     # vreg lane width
SUBLANE = 8    # vreg sublane count (f32)


def _round_up(v, m):
    return (v + m - 1) // m * m


def gru_cell_kernel(x_ref, h_ref, wx_ref, whh_ref, out_ref, *, hp):
    """One batch tile of the GRU cell. hp = hidden padded to a lane multiple.

    x_ref  : (tb, input_size + 1)  -- last feature is the constant 1.0 bias input
    wx_ref : (input_size + 1, 6*hp) -- [r | u | x_l | x_h | H | b_hh] column blocks
    whh_ref: (hp, hp)               -- h_h_linear weight (bias comes from block 6)
    """
    x = x_ref[...].astype(jnp.float32)
    h = h_ref[...].astype(jnp.float32)

    # Single fused MXU pass: all five x-side projections (+ their biases via the
    # ones column) and the broadcast of h_h_linear's bias.
    xz = jnp.dot(x, wx_ref[...], preferred_element_type=jnp.float32)

    # 128-aligned slices -> pure vreg selects, no cross-lane work.
    r = jax.nn.sigmoid(xz[:, 0 * hp:1 * hp])    # reset_gate(x)
    u = jax.nn.sigmoid(xz[:, 1 * hp:2 * hp])    # update_gate(x)
    xl = xz[:, 2 * hp:3 * hp]                   # x_l_linear(x)
    xh = xz[:, 3 * hp:4 * hp]                   # x_h_linear(x)
    xH = xz[:, 4 * hp:5 * hp]                   # H(x)
    bhh = xz[:, 5 * hp:6 * hp]                  # h_h_linear bias (broadcast rows)

    # h_h_linear(h_minus_one), computed once and reused by l_t and the tanh term.
    hh = jnp.dot(h, whh_ref[...], preferred_element_type=jnp.float32) + bhh

    l_t = jax.nn.sigmoid(xl + hh)
    h_hat = jnp.tanh(xh + r * hh) + l_t * xH

    # (1 - u) * h + u * h_hat == h + u * (h_hat - h)   (saves one VALU op)
    out_ref[...] = (h + u * (h_hat - h)).astype(out_ref.dtype)


def linear_transformation_enhanced_gru_cell(x, h_minus_one, params, *, block_b=128):
    """Fused forward pass. Weights stored as (in_features, out_features)."""
    B, input_size = x.shape
    hidden = h_minus_one.shape[1]
    hp = _round_up(hidden, LANE)        # lane-padded hidden width

    # ---- pack weights: lane-pad columns to hp, fold bias into an extra row ----
    def pack_block(w, b):
        blk = jnp.zeros((input_size + 1, hp), jnp.float32)
        blk = blk.at[:input_size, :hidden].set(w)
        blk = blk.at[input_size, :hidden].set(b.reshape(-1))   # bias row (ones feature)
        return blk

    blk_r = pack_block(params["w_r"], params["b_r"])
    blk_u = pack_block(params["w_u"], params["b_u"])
    blk_xl = pack_block(params["w_xl"], params["b_xl"])
    blk_xh = pack_block(params["w_xh"], params["b_xh"])
    blk_H = pack_block(params["w_H"], params["b_H"])
    # 6th block: zeros on x rows, h_h_linear's bias on the ones row.
    blk_bhh = jnp.zeros((input_size + 1, hp), jnp.float32)
    blk_bhh = blk_bhh.at[input_size, :hidden].set(params["b_hh"].reshape(-1))

    wx = jnp.concatenate([blk_r, blk_u, blk_xl, blk_xh, blk_H, blk_bhh], axis=1)

    whh = jnp.zeros((hp, hp), jnp.float32).at[:hidden, :hidden].set(params["w_hh"])

    # ---- pad activations: batch to a tile multiple, hidden to lane width ----
    tb = min(block_b, _round_up(B, SUBLANE))
    bpad = _round_up(B, tb)
    xp = jnp.zeros((bpad, input_size + 1), jnp.float32)
    xp = xp.at[:B, :input_size].set(x)
    xp = xp.at[:, input_size].set(1.0)                      # bias feature
    hpd = jnp.zeros((bpad, hp), jnp.float32).at[:B, :hidden].set(h_minus_one)

    grid = (bpad // tb,)
    out = pl.pallas_call(
        partial(gru_cell_kernel, hp=hp),
        out_shape=jax.ShapeDtypeStruct((bpad, hp), jnp.float32),
        grid=grid,
        in_specs=[
            pl.BlockSpec((tb, input_size + 1), lambda i: (i, 0)),        # x tile
            pl.BlockSpec((tb, hp), lambda i: (i, 0)),                    # h tile
            pl.BlockSpec((input_size + 1, 6 * hp), lambda i: (0, 0)),    # fused x-weights (resident)
            pl.BlockSpec((hp, hp), lambda i: (0, 0)),                    # w_hh (resident)
        ],
        out_specs=pl.BlockSpec((tb, hp), lambda i: (i, 0)),
        compiler_params=pltpu.CompilerParams(
            dimension_semantics=("parallel",)),   # megacore-shardable on v7x
    )(xp, hpd, wx, whh)

    return out[:B, :hidden]


def init_params(key, input_size, hidden_size):
    """Deterministic init mimicking torch.nn.Linear (uniform(-1/sqrt(fan_in)))."""
    def make_linear(k, fan_in, fan_out):
        kw, kb = jax.random.split(k)
        bound = 1.0 / math.sqrt(fan_in)
        w = jax.random.uniform(kw, (fan_in, fan_out), jnp.float32, -bound, bound)
        b = jax.random.uniform(kb, (1, fan_out), jnp.float32, -bound, bound)
        return w, b

    keys = jax.random.split(key, 6)
    params = {}
    params["w_r"], params["b_r"] = make_linear(keys[0], input_size, hidden_size)
    params["w_u"], params["b_u"] = make_linear(keys[1], input_size, hidden_size)
    params["w_xl"], params["b_xl"] = make_linear(keys[2], input_size, hidden_size)
    params["w_xh"], params["b_xh"] = make_linear(keys[3], input_size, hidden_size)
    params["w_hh"], params["b_hh"] = make_linear(keys[4], hidden_size, hidden_size)
    params["w_H"], params["b_H"] = make_linear(keys[5], input_size, hidden_size)
    return params


def reference_forward(x, h, p):
    """Plain-JAX reference mirroring the PyTorch forward."""
    lin = lambda a, w, b: a @ w + b
    r = jax.nn.sigmoid(lin(x, p["w_r"], p["b_r"]))
    u = jax.nn.sigmoid(lin(x, p["w_u"], p["b_u"]))
    hh = lin(h, p["w_hh"], p["b_hh"])
    l_t = jax.nn.sigmoid(lin(x, p["w_xl"], p["b_xl"]) + hh)
    h_hat = jnp.tanh(lin(x, p["w_xh"], p["b_xh"]) + r * hh) + l_t * lin(
        x, p["w_H"], p["b_H"]
    )
    return (1.0 - u) * h + u * h_hat


if __name__ == "__main__":
    B, INPUT_SIZE, HIDDEN_SIZE = 8, 16, 32

    key = jax.random.PRNGKey(0)
    k_x, k_h, k_p = jax.random.split(key, 3)

    x = jax.random.normal(k_x, (B, INPUT_SIZE), jnp.float32)
    h_minus_one = jax.random.normal(k_h, (B, HIDDEN_SIZE), jnp.float32)
    params = init_params(k_p, INPUT_SIZE, HIDDEN_SIZE)

    h_t = linear_transformation_enhanced_gru_cell(x, h_minus_one, params)
    h_t = jax.block_until_ready(h_t)

    ref = reference_forward(x, h_minus_one, params)
    assert h_t.shape == (B, HIDDEN_SIZE)
    assert jnp.allclose(h_t, ref, atol=1e-5, rtol=1e-5), "mismatch vs reference"

    print("KERNEL_OK")
</pallas_src>

<mosaic_0001>
module attributes {stable_mosaic.version = 11 : i64} {
  func.func @gru_cell_kernel(%arg0: i32, %arg1: memref<8x17xf32, #tpu.memory_space<vmem>>, %arg2: memref<8x128xf32, #tpu.memory_space<vmem>>, %arg3: memref<17x768xf32, #tpu.memory_space<vmem>>, %arg4: memref<128x128xf32, #tpu.memory_space<vmem>>, %arg5: memref<8x128xf32, #tpu.memory_space<vmem>>) attributes {dimension_semantics = [#tpu.dimension_semantics<parallel>], iteration_bounds = array<i64: 1>, scalar_prefetch = 0 : i64, scratch_operands = 0 : i64, tpu.core_type = #tpu.core_type<tc>, window_params = [{transform_indices = @transform_0, window_bounds = array<i64: 8, 17>}, {transform_indices = @transform_1, window_bounds = array<i64: 8, 128>}, {pipeline_mode = #tpu.pipeline_mode<synchronous>, transform_indices = @transform_2, window_bounds = array<i64: 17, 768>}, {pipeline_mode = #tpu.pipeline_mode<synchronous>, transform_indices = @transform_3, window_bounds = array<i64: 128, 128>}, {transform_indices = @transform_4, window_bounds = array<i64: 8, 128>}]} {
    %c0 = arith.constant 0 : index
    %c0_0 = arith.constant 0 : index
    %0 = vector.load %arg1[%c0, %c0_0] : memref<8x17xf32, #tpu.memory_space<vmem>>, vector<8x17xf32>
    %c0_1 = arith.constant 0 : index
    %c0_2 = arith.constant 0 : index
    %1 = vector.load %arg2[%c0_1, %c0_2] : memref<8x128xf32, #tpu.memory_space<vmem>>, vector<8x128xf32>
    %c0_3 = arith.constant 0 : index
    %c0_4 = arith.constant 0 : index
    %2 = vector.load %arg3[%c0_3, %c0_4] : memref<17x768xf32, #tpu.memory_space<vmem>>, vector<17x768xf32>
    %cst = arith.constant dense<0.000000e+00> : vector<8x768xf32>
    %3 = tpu.matmul %0, %2, %cst {dimension_numbers = #tpu.dot_dimension_numbers<[1], [0], [0], [1], [0, 0, 1, 1], [], []>} : vector<8x17xf32>, vector<17x768xf32>, vector<8x768xf32> -> vector<8x768xf32>
    %4 = vector.extract_strided_slice %3 {offsets = [0, 0], sizes = [8, 128], strides = [1, 1]} : vector<8x768xf32> to vector<8x128xf32>
    %5 = arith.negf %4 : vector<8x128xf32>
    %6 = math.exp %5 : vector<8x128xf32>
    %cst_5 = arith.constant 1.000000e+00 : f32
    %7 = vector.broadcast %cst_5 : f32 to vector<8x128xf32>
    %8 = arith.addf %7, %6 : vector<8x128xf32>
    %9 = arith.divf %7, %8 : vector<8x128xf32>
    %10 = vector.extract_strided_slice %3 {offsets = [0, 128], sizes = [8, 128], strides = [1, 1]} : vector<8x768xf32> to vector<8x128xf32>
    %11 = arith.negf %10 : vector<8x128xf32>
    %12 = math.exp %11 : vector<8x128xf32>
    %cst_6 = arith.constant 1.000000e+00 : f32
    %13 = vector.broadcast %cst_6 : f32 to vector<8x128xf32>
    %14 = arith.addf %13, %12 : vector<8x128xf32>
    %15 = arith.divf %13, %14 : vector<8x128xf32>
    %16 = vector.extract_strided_slice %3 {offsets = [0, 256], sizes = [8, 128], strides = [1, 1]} : vector<8x768xf32> to vector<8x128xf32>
    %17 = vector.extract_strided_slice %3 {offsets = [0, 384], sizes = [8, 128], strides = [1, 1]} : vector<8x768xf32> to vector<8x128xf32>
    %18 = vector.extract_strided_slice %3 {offsets = [0, 512], sizes = [8, 128], strides = [1, 1]} : vector<8x768xf32> to vector<8x128xf32>
    %19 = vector.extract_strided_slice %3 {offsets = [0, 640], sizes = [8, 128], strides = [1, 1]} : vector<8x768xf32> to vector<8x128xf32>
    %c0_7 = arith.constant 0 : index
    %c0_8 = arith.constant 0 : index
    %20 = vector.load %arg4[%c0_7, %c0_8] : memref<128x128xf32, #tpu.memory_space<vmem>>, vector<128x128xf32>
    %cst_9 = arith.constant dense<0.000000e+00> : vector<8x128xf32>
    %21 = tpu.matmul %1, %20, %cst_9 {dimension_numbers = #tpu.dot_dimension_numbers<[1], [0], [0], [1], [0, 0, 1, 1], [], []>} : vector<8x128xf32>, vector<128x128xf32>, vector<8x128xf32> -> vector<8x128xf32>
    %22 = arith.addf %21, %19 : vector<8x128xf32>
    %23 = arith.addf %16, %22 : vector<8x128xf32>
    %24 = arith.negf %23 : vector<8x128xf32>
    %25 = math.exp %24 : vector<8x128xf32>
    %cst_10 = arith.constant 1.000000e+00 : f32
    %26 = vector.broadcast %cst_10 : f32 to vector<8x128xf32>
    %27 = arith.addf %26, %25 : vector<8x128xf32>
    %28 = arith.divf %26, %27 : vector<8x128xf32>
    %29 = arith.mulf %9, %22 : vector<8x128xf32>
    %30 = arith.addf %17, %29 : vector<8x128xf32>
    %31 = math.tanh %30 : vector<8x128xf32>
    %32 = arith.mulf %28, %18 : vector<8x128xf32>
    %33 = arith.addf %31, %32 : vector<8x128xf32>
    %34 = arith.subf %33, %1 : vector<8x128xf32>
    %35 = arith.mulf %15, %34 : vector<8x128xf32>
    %36 = arith.addf %1, %35 : vector<8x128xf32>
    %c0_11 = arith.constant 0 : index
    %c0_12 = arith.constant 0 : index
    %37 = vector.load %arg5[%c0_11, %c0_12] : memref<8x128xf32, #tpu.memory_space<vmem>>, vector<8x128xf32>
    tpu.vector_store %arg5[%c0_11, %c0_12], %36 {strides = array<i32>} : memref<8x128xf32, #tpu.memory_space<vmem>>, vector<8x128xf32>,
    return
  }
  func.func @transform_0(%arg0: i32) -> (i32, i32) {
    %c0_i32 = arith.constant 0 : i32
    %c0_i32_0 = arith.constant 0 : i32
    return %arg0, %c0_i32 : i32, i32
  }
  func.func @transform_1(%arg0: i32) -> (i32, i32) {
    %c0_i32 = arith.constant 0 : i32
    %c0_i32_0 = arith.constant 0 : i32
    return %arg0, %c0_i32 : i32, i32
  }
  func.func @transform_2(%arg0: i32) -> (i32, i32) {
    %c0_i32 = arith.constant 0 : i32
    %c0_i32_0 = arith.constant 0 : i32
    %c0_i32_1 = arith.constant 0 : i32
    return %c0_i32, %c0_i32_0 : i32, i32
  }
  func.func @transform_3(%arg0: i32) -> (i32, i32) {
    %c0_i32 = arith.constant 0 : i32
    %c0_i32_0 = arith.constant 0 : i32
    %c0_i32_1 = arith.constant 0 : i32
    return %c0_i32, %c0_i32_0 : i32, i32
  }
  func.func @transform_4(%arg0: i32) -> (i32, i32) {
    %c0_i32 = arith.constant 0 : i32
    %c0_i32_0 = arith.constant 0 : i32
    return %arg0, %c0_i32 : i32, i32
  }
}

</mosaic_0001>

<llo_original>
// kernel: tpu_custom_call.1
$region0: #{tpu_custom_call.1}
  #allocation0 [shape = 'u32[]', space=smem, size = 0x4, offset = 0x4, fixed_abs, tag = 'smem constant byte address 0x4 - core index']
  #allocation1 [shape = 'u32[144,128]{1,0:T(1,128)}', space=vmem, size = 0x12000, scoped, tag = 'internal scratch']
  %s0 = inlined_call_operand.hbm [shape: f32[8,17], index: 0, kind: input, shape index: {}]
  %s1 = inlined_call_operand.hbm [shape: f32[8,128], index: 1, kind: input, shape index: {}]
  %s2 = inlined_call_operand.hbm [shape: f32[17,768], index: 2, kind: input, shape index: {}]
  %s3 = inlined_call_operand.hbm [shape: f32[128,128], index: 3, kind: input, shape index: {}]
  %s4 = inlined_call_operand.hbm [shape: f32[8,128], index: 4, kind: output, shape index: {}]
  %s5 = sld [smem:[#allocation0]]
  $region42: #{tpu_custom_call.1} parent=0
    _
  %s7 = ssub.s32 1, %s5
  %s8 = scalar_select 0, %s7, %s5
  $region1: #{tpu_custom_call.1} parent=0
    #allocation2 [shape = 'u8[4096]{0}', space=vmem, size = 0x1000, scoped, tag = 'input window, operand 0, single buffered']
    #allocation3 [shape = 's32[1]{0}', space=sflag, size = 0x4, scoped, tag = 'scoped memory for tpu_custom_call.1']
    #allocation4 [shape = 's32[1]{0}', space=sflag, size = 0x4, scoped, tag = 'scoped memory for tpu_custom_call.1']
    #allocation5 [shape = 'u8[4096]{0}', space=vmem, size = 0x1000, scoped, tag = 'input window, operand 1, single buffered']
    #allocation6 [shape = 's32[1]{0}', space=sflag, size = 0x4, scoped, tag = 'scoped memory for tpu_custom_call.1']
    #allocation7 [shape = 'u8[73728]{0}', space=vmem, size = 0x12000, scoped, tag = 'input window, operand 2, single buffered']
    #allocation8 [shape = 'u8[65536]{0}', space=vmem, size = 0x10000, scoped, tag = 'input window, operand 3, single buffered']
    #allocation9 [shape = 's32[1]{0}', space=sflag, size = 0x4, scoped, tag = 'scoped memory for tpu_custom_call.1']
    #allocation10 [shape = 'u8[4096]{0}', space=vmem, size = 0x1000, scoped, tag = 'output window, operand 0, single buffered']
    %9 = vsyncpa [#allocation3], 0
    %10 = vsyncpa [#allocation6], 0
    %11 = vsyncpa [#allocation9], 0
    %12 = vsyncpa [#allocation4], 0
    // Predicated region
    $region2: #{tpu_custom_call.1} parent=1 // pred_check
      _
    $region3: #{tpu_custom_call.1} parent=1 // pred_check_branch
      %14 = sbr.rel (0) target = $region5
    $region4: #{tpu_custom_call.1} parent=1 // pred_region
      %s16 = ssub.s32 128, 128
      %17 = vsyncadd [#allocation3], %s16
      %s19 = sshll.u32 [#allocation2], 4
      %s20 = int_to_ptr.vmem [resolvable:$true] %s19
      %22 = dma.hbm_to_vmem [thread:$0]  %s0, 128, %s20, [#allocation3]
    $region5: #{tpu_custom_call.1} parent=1 // pred_fallthru
      _
    // Predicated region
    $region6: #{tpu_custom_call.1} parent=1 // pred_check
      _
    $region7: #{tpu_custom_call.1} parent=1 // pred_check_branch
      %24 = sbr.rel (0) target = $region9
    $region8: #{tpu_custom_call.1} parent=1 // pred_region
      %s26 = ssub.s32 128, 128
      %27 = vsyncadd [#allocation6], %s26
      %s29 = sshll.u32 [#allocation5], 4
      %s30 = int_to_ptr.vmem [resolvable:$true] %s29
      %32 = dma.hbm_to_vmem [thread:$0]  %s1, 128, %s30, [#allocation6]
    $region9: #{tpu_custom_call.1} parent=1 // pred_fallthru
      _
    // Predicated region
    $region10: #{tpu_custom_call.1} parent=1 // pred_check
      _
    $region11: #{tpu_custom_call.1} parent=1 // pred_check_branch
      %34 = sbr.rel (0) target = $region13
    $region12: #{tpu_custom_call.1} parent=1 // pred_region
      %s36 = ssub.s32 2304, 2304
      %37 = vsyncadd [#allocation6], %s36
      %s38 = sshll.u32 [#allocation7], 4
      %s39 = int_to_ptr.vmem [resolvable:$true] %s38
      %44 = dma.hbm_to_vmem [thread:$0]  %s2, 2304, %s39, [#allocation6], 768, 768, 48
    $region13: #{tpu_custom_call.1} parent=1 // pred_fallthru
      _
    // Predicated region
    $region14: #{tpu_custom_call.1} parent=1 // pred_check
      _
    $region15: #{tpu_custom_call.1} parent=1 // pred_check_branch
      %46 = sbr.rel (0) target = $region17
    $region16: #{tpu_custom_call.1} parent=1 // pred_region
      %s48 = ssub.s32 2048, 2048
      %49 = vsyncadd [#allocation9], %s48
      %s50 = sshll.u32 [#allocation8], 4
      %s51 = int_to_ptr.vmem [resolvable:$true] %s50
      %56 = dma.hbm_to_vmem [thread:$0]  %s3, 2048, %s51, [#allocation9], 128, 128, 8
    $region17: #{tpu_custom_call.1} parent=1 // pred_fallthru
      _
    // Predicated region
    $region18: #{tpu_custom_call.1} parent=1 // pred_check
      _
    $region19: #{tpu_custom_call.1} parent=1 // pred_check_branch
      %58 = sbr.rel (0) target = $region21
    $region20: #{tpu_custom_call.1} parent=1 // pred_region
      %59 = dma.done [#allocation3], 128
    $region21: #{tpu_custom_call.1} parent=1 // pred_fallthru
      _
    // Predicated region
    $region22: #{tpu_custom_call.1} parent=1 // pred_check
      _
    $region23: #{tpu_custom_call.1} parent=1 // pred_check_branch
      %61 = sbr.rel (0) target = $region25
    $region24: #{tpu_custom_call.1} parent=1 // pred_region
      %62 = dma.done [#allocation6], 128
    $region25: #{tpu_custom_call.1} parent=1 // pred_fallthru
      _
    // Predicated region
    $region26: #{tpu_custom_call.1} parent=1 // pred_check
      _
    $region27: #{tpu_custom_call.1} parent=1 // pred_check_branch
      %64 = sbr.rel (0) target = $region29
    $region28: #{tpu_custom_call.1} parent=1 // pred_region
      %65 = dma.done [#allocation6], 2304
    $region29: #{tpu_custom_call.1} parent=1 // pred_fallthru
      _
    // Predicated region
    $region30: #{tpu_custom_call.1} parent=1 // pred_check
      _
    $region31: #{tpu_custom_call.1} parent=1 // pred_check_branch
      %67 = sbr.rel (0) target = $region33
    $region32: #{tpu_custom_call.1} parent=1 // pred_region
      %68 = dma.done [#allocation9], 2048
    $region33: #{tpu_custom_call.1} parent=1 // pred_fallthru
      _
    %v69 = vld [vmem:[#allocation2] sm:$0xff]
    %v70 = vld [vmem:[#allocation5] sm:$0xff]
    %v71 = vld [vmem:[#allocation7] sm:$0xff]
    %v72 = vld [vmem:[#allocation7 + $0x8] sm:$0xff]
    %v73 = vld [vmem:[#allocation7 + $0x10] sm:$0xff]
    %v74 = vld [vmem:[#allocation7 + $0x18] sm:$0xff]
    %v75 = vld [vmem:[#allocation7 + $0x20] sm:$0xff]
    %v76 = vld [vmem:[#allocation7 + $0x28] sm:$0xff]
    %v77 = vld [vmem:[#allocation7 + $0x30] sm:$0xff]
    %v78 = vld [vmem:[#allocation7 + $0x38] sm:$0xff]
    %v79 = vld [vmem:[#allocation7 + $0x40] sm:$0xff]
    %v80 = vld [vmem:[#allocation7 + $0x48] sm:$0xff]
    %v81 = vld [vmem:[#allocation7 + $0x50] sm:$0xff]
    %v82 = vld [vmem:[#allocation7 + $0x58] sm:$0xff]
    %v83 = vld [vmem:[#allocation7 + $0x60] sm:$0x1]
    %v84 = vld [vmem:[#allocation7 + $0x68] sm:$0x1]
    %v85 = vld [vmem:[#allocation7 + $0x70] sm:$0x1]
    %v86 = vld [vmem:[#allocation7 + $0x78] sm:$0x1]
    %v87 = vld [vmem:[#allocation7 + $0x80] sm:$0x1]
    %v88 = vld [vmem:[#allocation7 + $0x88] sm:$0x1]
    %vm89 = vcmask 138240
    %v91 = vsel %vm89, %v69, 0
    %vm93 = vcmask 1040384
    %v95 = vsel %vm93, %v83, 0
    %v98 = vsel %vm93, %v84, 0
    %v101 = vsel %vm93, %v85, 0
    %v104 = vsel %vm93, %v86, 0
    %v107 = vsel %vm93, %v87, 0
    %v110 = vsel %vm93, %v88, 0
    %112 = vmatprep.subr.mxu0 0.0
    %113 = vmatpush1.msra.mxu0 0.0
    %114 = vmatprep.subr.mxu0 0.0
    %115 = vmatpush1.msra.mxu0 0.0
    %116 = vmatprep.subr.mxu0 0.0
    %117 = vmatpush1.msra.mxu0 0.0
    %118 = vmatprep.subr.mxu0 0.0
    %119 = vmatpush1.msra.mxu0 0.0
    %120 = vmatprep.subr.mxu0 0.0
    %121 = vmatpush1.msra.mxu0 0.0
    %122 = vmatprep.subr.mxu0 0.0
    %123 = vmatpush1.msra.mxu0 0.0
    %124 = vmatprep.subr.mxu0 0.0
    %125 = vmatpush1.msra.mxu0 0.0
    %126 = vmatprep.subr.mxu0 0.0
    %127 = vmatpush1.msra.mxu0 0.0
    %128 = vmatprep.subr.mxu0 0.0
    %129 = vmatpush1.msra.mxu0 0.0
    %130 = vmatprep.subr.mxu0 0.0
    %131 = vmatpush1.msra.mxu0 0.0
    %132 = vmatprep.subr.mxu0 0.0
    %133 = vmatpush1.msra.mxu0 0.0
    %134 = vmatprep.subr.mxu0 0.0
    %135 = vmatpush1.msra.mxu0 0.0
    %136 = vmatprep.subr.mxu0 0.0
    %137 = vmatpush1.msra.mxu0 0.0
    %138 = vmatprep.subr.mxu0 %v98
    %139 = vmatpush1.msra.mxu0 %v95
    %140 = vmatprep.subr.mxu0 %v78
    %141 = vmatpush1.msra.mxu0 %v77
    %142 = vmatprep.subr.mxu0 %v72
    %143 = vmatpush1.msra.mxu0 %v71
    %144 = vmatprep.subr.mxu0 0.0
    %145 = vmatpush2.msra.mxu0 0.0
    %146 = vmatprep.subr.mxu0 0.0
    %147 = vmatpush2.msra.mxu0 0.0
    %148 = vmatprep.subr.mxu0 0.0
    %149 = vmatpush2.msra.mxu0 0.0
    %150 = vmatprep.subr.mxu0 0.0
    %151 = vmatpush2.msra.mxu0 0.0
    %152 = vmatprep.subr.mxu0 0.0
    %153 = vmatpush2.msra.mxu0 0.0
    %154 = vmatprep.subr.mxu0 0.0
    %155 = vmatpush2.msra.mxu0 0.0
    %156 = vmatprep.subr.mxu0 0.0
    %157 = vmatpush2.msra.mxu0 0.0
    %158 = vmatprep.subr.mxu0 0.0
    %159 = vmatpush2.msra.mxu0 0.0
    %160 = vmatprep.subr.mxu0 0.0
    %161 = vmatpush2.msra.mxu0 0.0
    %162 = vmatprep.subr.mxu0 0.0
    %163 = vmatpush2.msra.mxu0 0.0
    %164 = vmatprep.subr.mxu0 0.0
    %165 = vmatpush2.msra.mxu0 0.0
    %166 = vmatprep.subr.mxu0 0.0
    %167 = vmatpush2.msra.mxu0 0.0
    %168 = vmatprep.subr.mxu0 0.0
    %169 = vmatpush2.msra.mxu0 0.0
    %170 = vmatprep.subr.mxu0 0.0
    %171 = vmatpush2.msra.mxu0 0.0
    %172 = vmatprep.subr.mxu0 0.0
    %173 = vmatpush2.msra.mxu0 0.0
    %174 = vmatprep.subr.mxu0 0.0
    %175 = vmatpush2.msra.mxu0 0.0
    %176 = vmatprep.mubr.f32.mxu0 0.0
    %177 = vmatmul.mubr.f32.gmra.mxu0 %v91
    %v178 = vpop.f32.mrf.mxu0
    %v179 = vadd.f32 0.0, %v178
    %v180 = vpop.f32.mrf.mxu0
    %v181 = vadd.f32 0.0, %v180
    %182 = vdwg.mxu0
    %183 = vmatprep.subr.mxu0 0.0
    %184 = vmatpush1.msra.mxu0 0.0
    %185 = vmatprep.subr.mxu0 0.0
    %186 = vmatpush1.msra.mxu0 0.0
    %187 = vmatprep.subr.mxu0 0.0
    %188 = vmatpush1.msra.mxu0 0.0
    %189 = vmatprep.subr.mxu0 0.0
    %190 = vmatpush1.msra.mxu0 0.0
    %191 = vmatprep.subr.mxu0 0.0
    %192 = vmatpush1.msra.mxu0 0.0
    %193 = vmatprep.subr.mxu0 0.0
    %194 = vmatpush1.msra.mxu0 0.0
    %195 = vmatprep.subr.mxu0 0.0
    %196 = vmatpush1.msra.mxu0 0.0
    %197 = vmatprep.subr.mxu0 0.0
    %198 = vmatpush1.msra.mxu0 0.0
    %199 = vmatprep.subr.mxu0 0.0
    %200 = vmatpush1.msra.mxu0 0.0
    %201 = vmatprep.subr.mxu0 0.0
    %202 = vmatpush1.msra.mxu0 0.0
    %203 = vmatprep.subr.mxu0 0.0
    %204 = vmatpush1.msra.mxu0 0.0
    %205 = vmatprep.subr.mxu0 0.0
    %206 = vmatpush1.msra.mxu0 0.0
    %207 = vmatprep.subr.mxu0 0.0
    %208 = vmatpush1.msra.mxu0 0.0
    %209 = vmatprep.subr.mxu0 %v104
    %210 = vmatpush1.msra.mxu0 %v101
    %211 = vmatprep.subr.mxu0 %v80
    %212 = vmatpush1.msra.mxu0 %v79
    %213 = vmatprep.subr.mxu0 %v74
    %214 = vmatpush1.msra.mxu0 %v73
    %215 = vmatprep.subr.mxu0 0.0
    %216 = vmatpush2.msra.mxu0 0.0
    %217 = vmatprep.subr.mxu0 0.0
    %218 = vmatpush2.msra.mxu0 0.0
    %219 = vmatprep.subr.mxu0 0.0
    %220 = vmatpush2.msra.mxu0 0.0
    %221 = vmatprep.subr.mxu0 0.0
    %222 = vmatpush2.msra.mxu0 0.0
    %223 = vmatprep.subr.mxu0 0.0
    %224 = vmatpush2.msra.mxu0 0.0
    %225 = vmatprep.subr.mxu0 0.0
    %226 = vmatpush2.msra.mxu0 0.0
    %227 = vmatprep.subr.mxu0 0.0
    %228 = vmatpush2.msra.mxu0 0.0
    %229 = vmatprep.subr.mxu0 0.0
    %230 = vmatpush2.msra.mxu0 0.0
    %231 = vmatprep.subr.mxu0 0.0
    %232 = vmatpush2.msra.mxu0 0.0
    %233 = vmatprep.subr.mxu0 0.0
    %234 = vmatpush2.msra.mxu0 0.0
    %235 = vmatprep.subr.mxu0 0.0
    %236 = vmatpush2.msra.mxu0 0.0
    %237 = vmatprep.subr.mxu0 0.0
    %238 = vmatpush2.msra.mxu0 0.0
    %239 = vmatprep.subr.mxu0 0.0
    %240 = vmatpush2.msra.mxu0 0.0
    %241 = vmatprep.subr.mxu0 0.0
    %242 = vmatpush2.msra.mxu0 0.0
    %243 = vmatprep.subr.mxu0 0.0
    %244 = vmatpush2.msra.mxu0 0.0
    %245 = vmatprep.subr.mxu0 0.0
    %246 = vmatpush2.msra.mxu0 0.0
    %247 = vmatprep.mubr.f32.mxu0 0.0
    %248 = vmatmul.mubr.f32.gmra.mxu0 %v91
    %v249 = vpop.f32.mrf.mxu0
    %v250 = vadd.f32 0.0, %v249
    %v251 = vpop.f32.mrf.mxu0
    %v252 = vadd.f32 0.0, %v251
    %253 = vdwg.mxu0
    %254 = vmatprep.subr.mxu0 0.0
    %255 = vmatpush1.msra.mxu0 0.0
    %256 = vmatprep.subr.mxu0 0.0
    %257 = vmatpush1.msra.mxu0 0.0
    %258 = vmatprep.subr.mxu0 0.0
    %259 = vmatpush1.msra.mxu0 0.0
    %260 = vmatprep.subr.mxu0 0.0
    %261 = vmatpush1.msra.mxu0 0.0
    %262 = vmatprep.subr.mxu0 0.0
    %263 = vmatpush1.msra.mxu0 0.0
    %264 = vmatprep.subr.mxu0 0.0
    %265 = vmatpush1.msra.mxu0 0.0
    %266 = vmatprep.subr.mxu0 0.0
    %267 = vmatpush1.msra.mxu0 0.0
    %268 = vmatprep.subr.mxu0 0.0
    %269 = vmatpush1.msra.mxu0 0.0
    %270 = vmatprep.subr.mxu0 0.0
    %271 = vmatpush1.msra.mxu0 0.0
    %272 = vmatprep.subr.mxu0 0.0
    %273 = vmatpush1.msra.mxu0 0.0
    %274 = vmatprep.subr.mxu0 0.0
    %275 = vmatpush1.msra.mxu0 0.0
    %276 = vmatprep.subr.mxu0 0.0
    %277 = vmatpush1.msra.mxu0 0.0
    %278 = vmatprep.subr.mxu0 0.0
    %279 = vmatpush1.msra.mxu0 0.0
    %280 = vmatprep.subr.mxu0 %v110
    %281 = vmatpush1.msra.mxu0 %v107
    %282 = vmatprep.subr.mxu0 %v82
    %283 = vmatpush1.msra.mxu0 %v81
    %284 = vmatprep.subr.mxu0 %v76
    %285 = vmatpush1.msra.mxu0 %v75
    %286 = vmatprep.subr.mxu0 0.0
    %287 = vmatpush2.msra.mxu0 0.0
    %288 = vmatprep.subr.mxu0 0.0
    %289 = vmatpush2.msra.mxu0 0.0
    %290 = vmatprep.subr.mxu0 0.0
    %291 = vmatpush2.msra.mxu0 0.0
    %292 = vmatprep.subr.mxu0 0.0
    %293 = vmatpush2.msra.mxu0 0.0
    %294 = vmatprep.subr.mxu0 0.0
    %295 = vmatpush2.msra.mxu0 0.0
    %296 = vmatprep.subr.mxu0 0.0
    %297 = vmatpush2.msra.mxu0 0.0
    %298 = vmatprep.subr.mxu0 0.0
    %299 = vmatpush2.msra.mxu0 0.0
    %300 = vmatprep.subr.mxu0 0.0
    %301 = vmatpush2.msra.mxu0 0.0
    %302 = vmatprep.subr.mxu0 0.0
    %303 = vmatpush2.msra.mxu0 0.0
    %304 = vmatprep.subr.mxu0 0.0
    %305 = vmatpush2.msra.mxu0 0.0
    %306 = vmatprep.subr.mxu0 0.0
    %307 = vmatpush2.msra.mxu0 0.0
    %308 = vmatprep.subr.mxu0 0.0
    %309 = vmatpush2.msra.mxu0 0.0
    %310 = vmatprep.subr.mxu0 0.0
    %311 = vmatpush2.msra.mxu0 0.0
    %312 = vmatprep.subr.mxu0 0.0
    %313 = vmatpush2.msra.mxu0 0.0
    %314 = vmatprep.subr.mxu0 0.0
    %315 = vmatpush2.msra.mxu0 0.0
    %316 = vmatprep.subr.mxu0 0.0
    %317 = vmatpush2.msra.mxu0 0.0
    %318 = vmatprep.mubr.f32.mxu0 0.0
    %319 = vmatmul.mubr.f32.gmra.mxu0 %v91
    %v320 = vpop.f32.mrf.mxu0
    %v321 = vadd.f32 0.0, %v320
    %v322 = vpop.f32.mrf.mxu0
    %v323 = vadd.f32 0.0, %v322
    %324 = vdwg.mxu0
    %v325 = vxor.u32 %v179, 2147483648
    %v326 = vmul.f32 %v325, 1.442695
    %v327 = vpow.pop %v326
    %v328 = vadd.f32 %v327, 1.0
    %v329 = vrcp.pop %v328
    %v330 = vmul.f32 1.0, %v329
    %v331 = vxor.u32 %v181, 2147483648
    %v332 = vmul.f32 %v331, 1.442695
    %v333 = vpow.pop %v332
    %v334 = vadd.f32 %v333, 1.0
    %v335 = vrcp.pop %v334
    %v336 = vmul.f32 1.0, %v335
    %v337 = vld [vmem:[#allocation8] sm:$0xff]
    %v338 = vld [vmem:[#allocation8 + $0x8] sm:$0xff]
    %v339 = vld [vmem:[#allocation8 + $0x10] sm:$0xff]
    %v340 = vld [vmem:[#allocation8 + $0x18] sm:$0xff]
    %v341 = vld [vmem:[#allocation8 + $0x20] sm:$0xff]
    %v342 = vld [vmem:[#allocation8 + $0x28] sm:$0xff]
    %v343 = vld [vmem:[#allocation8 + $0x30] sm:$0xff]
    %v344 = vld [vmem:[#allocation8 + $0x38] sm:$0xff]
    %v345 = vld [vmem:[#allocation8 + $0x40] sm:$0xff]
    %v346 = vld [vmem:[#allocation8 + $0x48] sm:$0xff]
    %v347 = vld [vmem:[#allocation8 + $0x50] sm:$0xff]
    %v348 = vld [vmem:[#allocation8 + $0x58] sm:$0xff]
    %v349 = vld [vmem:[#allocation8 + $0x60] sm:$0xff]
    %v350 = vld [vmem:[#allocation8 + $0x68] sm:$0xff]
    %v351 = vld [vmem:[#allocation8 + $0x70] sm:$0xff]
    %v352 = vld [vmem:[#allocation8 + $0x78] sm:$0xff]
    %353 = vmatprep.subr.mxu0 0.0
    %354 = vmatpush1.msra.mxu0 %v352
    %355 = vmatprep.subr.mxu0 0.0
    %356 = vmatpush1.msra.mxu0 %v351
    %357 = vmatprep.subr.mxu0 0.0
    %358 = vmatpush1.msra.mxu0 %v350
    %359 = vmatprep.subr.mxu0 0.0
    %360 = vmatpush1.msra.mxu0 %v349
    %361 = vmatprep.subr.mxu0 0.0
    %362 = vmatpush1.msra.mxu0 %v348
    %363 = vmatprep.subr.mxu0 0.0
    %364 = vmatpush1.msra.mxu0 %v347
    %365 = vmatprep.subr.mxu0 0.0
    %366 = vmatpush1.msra.mxu0 %v346
    %367 = vmatprep.subr.mxu0 0.0
    %368 = vmatpush1.msra.mxu0 %v345
    %369 = vmatprep.subr.mxu0 0.0
    %370 = vmatpush1.msra.mxu0 %v344
    %371 = vmatprep.subr.mxu0 0.0
    %372 = vmatpush1.msra.mxu0 %v343
    %373 = vmatprep.subr.mxu0 0.0
    %374 = vmatpush1.msra.mxu0 %v342
    %375 = vmatprep.subr.mxu0 0.0
    %376 = vmatpush1.msra.mxu0 %v341
    %377 = vmatprep.subr.mxu0 0.0
    %378 = vmatpush1.msra.mxu0 %v340
    %379 = vmatprep.subr.mxu0 0.0
    %380 = vmatpush1.msra.mxu0 %v339
    %381 = vmatprep.subr.mxu0 0.0
    %382 = vmatpush1.msra.mxu0 %v338
    %383 = vmatprep.subr.mxu0 0.0
    %384 = vmatpush1.msra.mxu0 %v337
    %385 = vmatprep.subr.mxu0 0.0
    %386 = vmatpush2.msra.mxu0 0.0
    %387 = vmatprep.subr.mxu0 0.0
    %388 = vmatpush2.msra.mxu0 0.0
    %389 = vmatprep.subr.mxu0 0.0
    %390 = vmatpush2.msra.mxu0 0.0
    %391 = vmatprep.subr.mxu0 0.0
    %392 = vmatpush2.msra.mxu0 0.0
    %393 = vmatprep.subr.mxu0 0.0
    %394 = vmatpush2.msra.mxu0 0.0
    %395 = vmatprep.subr.mxu0 0.0
    %396 = vmatpush2.msra.mxu0 0.0
    %397 = vmatprep.subr.mxu0 0.0
    %398 = vmatpush2.msra.mxu0 0.0
    %399 = vmatprep.subr.mxu0 0.0
    %400 = vmatpush2.msra.mxu0 0.0
    %401 = vmatprep.subr.mxu0 0.0
    %402 = vmatpush2.msra.mxu0 0.0
    %403 = vmatprep.subr.mxu0 0.0
    %404 = vmatpush2.msra.mxu0 0.0
    %405 = vmatprep.subr.mxu0 0.0
    %406 = vmatpush2.msra.mxu0 0.0
    %407 = vmatprep.subr.mxu0 0.0
    %408 = vmatpush2.msra.mxu0 0.0
    %409 = vmatprep.subr.mxu0 0.0
    %410 = vmatpush2.msra.mxu0 0.0
    %411 = vmatprep.subr.mxu0 0.0
    %412 = vmatpush2.msra.mxu0 0.0
    %413 = vmatprep.subr.mxu0 0.0
    %414 = vmatpush2.msra.mxu0 0.0
    %415 = vmatprep.subr.mxu0 0.0
    %416 = vmatpush2.msra.mxu0 0.0
    %417 = vmatprep.mubr.f32.mxu0 0.0
    %418 = vmatmul.mubr.f32.gmra.mxu0 %v70
    %v419 = vpop.f32.mrf.mxu0
    %v420 = vadd.f32 %v323, %v419
    %v421 = vpop.f32.mrf.mxu0
    %422 = vdwg.mxu0
    %v423 = vadd.f32 %v250, %v420
    %v424 = vxor.u32 %v423, 2147483648
    %v425 = vmul.f32 %v424, 1.442695
    %v426 = vpow.pop %v425
    %v427 = vadd.f32 %v426, 1.0
    %v428 = vrcp.pop %v427
    %v429 = vmul.f32 1.0, %v428
    %v430 = vmul.f32 %v330, %v420
    %v431 = vadd.f32 %v252, %v430
    %v432 = vtanh.pop %v431
    %v433 = vmul.f32 %v429, %v321
    %v434 = vadd.f32 %v432, %v433
    %v435 = vsub.f32 %v434, %v70
    %v436 = vmul.f32 %v336, %v435
    %v437 = vadd.f32 %v70, %v436
    %438 = vst [vmem:[#allocation10] sm:$0xff] %v437
    // Predicated region
    $region34: #{tpu_custom_call.1} parent=1 // pred_check
      _
    $region35: #{tpu_custom_call.1} parent=1 // pred_check_branch
      %440 = sbr.rel (0) target = $region37
    $region36: #{tpu_custom_call.1} parent=1 // pred_region
      %s442 = ssub.s32 128, 128
      %443 = vsyncadd [#allocation4], %s442
      %s445 = sshll.u32 [#allocation10], 4
      %s446 = int_to_ptr.vmem [resolvable:$true] %s445
      %448 = dma.vmem_to_hbm [thread:$0]  %s446, 128, %s4, [#allocation4]
    $region37: #{tpu_custom_call.1} parent=1 // pred_fallthru
      _
    // Predicated region
    $region38: #{tpu_custom_call.1} parent=1 // pred_check
      _
    $region39: #{tpu_custom_call.1} parent=1 // pred_check_branch
      %450 = sbr.rel (0) target = $region41
    $region40: #{tpu_custom_call.1} parent=1 // pred_region
      %451 = dma.done [#allocation4], 128
    $region41: #{tpu_custom_call.1} parent=1 // pred_fallthru
      _
    %452 = vsyncpa [#allocation3], 1
    %453 = vsyncpa [#allocation6], 1
    %454 = vsyncpa [#allocation9], 1
    %455 = vsyncpa [#allocation4], 1

</llo_original>
